<compile_context>
chip_gen: v6e
topology: v6e:2x2x1
jax: 0.10.0
libtpu: 0.0.40
codegen_flags: <defaults>
</compile_context>

<pallas_src>
import functools

import jax
import jax.numpy as jnp
from jax import lax
from jax.experimental import pallas as pl
from jax.experimental.pallas import tpu as pltpu

IN_FEATURES = 512


def _round_up(x, m):
    return ((x + m - 1) // m) * m


def _cdiv(a, b):
    return -(-a // b)


def _make_fused_kernel(n_heads):
    """Kernel refs: [x_0..x_{n-1} (tb,512), w (n,512) VMEM, b (n,) SMEM, o (tb,n)]."""

    def kernel(*refs):
        x_refs = refs[:n_heads]
        w_ref = refs[n_heads]          # (n_heads, 512) VMEM, lane-dense
        b_ref = refs[n_heads + 1]      # (n_heads,)     SMEM scalars
        o_ref = refs[n_heads + 2]      # (tb, n_heads)  VMEM

        w = w_ref[...]                                              # (n, 512)
        col = lax.broadcasted_iota(jnp.int32, (1, n_heads), 1)      # (1, n)
        acc = jnp.zeros(o_ref.shape, jnp.float32)                   # (tb, n)
        for h in range(n_heads):                                    # unrolled
            x = x_refs[h][...]                                      # (tb, 512) f32
            # MXU contraction (vector-extended slot, idle otherwise); the reduce
            # stays off the VPU/XLU so all compute hides under the input DMA.
            s_all = lax.dot_general(
                x, w, dimension_numbers=(((1,), (1,)), ((), ())),
                preferred_element_type=jnp.float32)                 # (tb, n)
            # Keep only head h's column; fold in the scalar bias from SMEM.
            acc = acc + jnp.where(col == h, s_all + b_ref[h], 0.0)
        o_ref[...] = jax.nn.sigmoid(acc).astype(o_ref.dtype)

    return kernel


@functools.partial(jax.jit, static_argnames=("block_b",))
def fc_sigmoid_heads(xs, ws, bs, block_b=None):
    """sigmoid(xs[h] @ ws[h].T + bs[h]) for all heads in one pallas_call.

    xs: tuple of (B, 512) arrays (one per head, all same B)
    ws: (n_heads, 512) weights, bs: (n_heads,) biases
    Returns a single (B, n_heads) array (column h = head h's output).
    """
    n = len(xs)
    B, D = xs[0].shape
    assert D == IN_FEATURES

    if block_b is None:
        # ~1024 rows/head for 4 heads: 8 MiB/step, 16 MiB double-buffered inputs.
        block_b = max(8, (4096 // n) // 8 * 8)
    tb = min(block_b, _round_up(B, 8))
    tb = max(8, (tb // 8) * 8)
    # If the whole batch fits one tile but is large, split into >=2 tiles so the
    # "parallel" axis can be sharded across both v7x TensorCores.
    if _cdiv(B, tb) < 2 and B >= 512:
        tb = max(8, _round_up(_cdiv(B, 2), 8))
    num_tiles = _cdiv(B, tb)   # non-divisible grid: partial last block handled by Pallas

    in_specs = [pl.BlockSpec((tb, D), lambda i: (i, 0)) for _ in range(n)]
    in_specs.append(pl.BlockSpec((n, D), lambda i: (0, 0)))                 # weights (VMEM)
    in_specs.append(pl.BlockSpec(memory_space=pltpu.MemorySpace.SMEM))      # biases  (SMEM)
    out_specs = pl.BlockSpec((tb, n), lambda i: (i, 0))
    out_shape = jax.ShapeDtypeStruct((B, n), xs[0].dtype)

    cost = pl.CostEstimate(
        flops=2 * n * B * D,
        transcendentals=n * B,
        bytes_accessed=n * B * D * 4 + n * D * 4 + n * 4 + B * n * 4,
    )

    return pl.pallas_call(
        _make_fused_kernel(n),
        out_shape=out_shape,
        grid_spec=pltpu.PrefetchScalarGridSpec(
            num_scalar_prefetch=0,
            grid=(num_tiles,),
            in_specs=in_specs,
            out_specs=out_specs,
        ),
        compiler_params=pltpu.CompilerParams(
            dimension_semantics=("parallel",),
            vmem_limit_bytes=32 * 1024 * 1024),
        cost_estimate=cost,
    )(*xs, ws, bs)


class FcLayerStage1:
    """JAX/Pallas port of the PyTorch FcLayerStage1 module."""

    HEAD_NAMES = ("fc1", "fc1_1", "fc1_2", "fc1_3")

    def __init__(self, key):
        # Deterministic init mimicking nn.Linear default: U(-1/sqrt(512), 1/sqrt(512))
        bound = 1.0 / (IN_FEATURES ** 0.5)
        keys = jax.random.split(key, 8)
        self.params = {}
        for idx, name in enumerate(self.HEAD_NAMES):
            w = jax.random.uniform(
                keys[2 * idx], (1, IN_FEATURES), jnp.float32, -bound, bound)
            b = jax.random.uniform(
                keys[2 * idx + 1], (1,), jnp.float32, -bound, bound)
            self.params[name] = (w, b)
        # Pre-stacked weights/biases for the fused kernel (tiny, done once).
        self._w_stack = jnp.concatenate(
            [self.params[n][0] for n in self.HEAD_NAMES], axis=0)   # (4, 512)
        self._b_stack = jnp.concatenate(
            [self.params[n][1] for n in self.HEAD_NAMES], axis=0)   # (4,)
        self.training = True

    def eval(self):
        self.training = False
        return self

    def train(self):
        self.training = True
        return self

    def __call__(self, x, x1=None, x2=None, x3=None):
        if self.training:
            out = fc_sigmoid_heads(
                (x, x1, x2, x3), self._w_stack, self._b_stack)      # (B, 4)
            return tuple(out[:, h:h + 1] for h in range(4))
        out = fc_sigmoid_heads((x,), self._w_stack[:1], self._b_stack[:1])  # (B, 1)
        return out


def _ref_fc_sigmoid(x, w, b):
    return jax.nn.sigmoid(x @ w.T + b)


if __name__ == "__main__":
    key = jax.random.PRNGKey(0)
    k_mod, kx, kx1, kx2, kx3, kxe, kbig = jax.random.split(key, 7)

    model = FcLayerStage1(k_mod)
    names = ["fc1", "fc1_1", "fc1_2", "fc1_3"]

    # --- training-mode path: all four heads fused in one pallas_call ---
    B = 8
    x = jax.random.normal(kx, (B, IN_FEATURES), jnp.float32)
    x1 = jax.random.normal(kx1, (B, IN_FEATURES), jnp.float32)
    x2 = jax.random.normal(kx2, (B, IN_FEATURES), jnp.float32)
    x3 = jax.random.normal(kx3, (B, IN_FEATURES), jnp.float32)

    outs = jax.block_until_ready(model(x, x1, x2, x3))
    for out, name, inp in zip(outs, names, [x, x1, x2, x3]):
        w, b = model.params[name]
        ref = _ref_fc_sigmoid(inp, w, b)
        assert out.shape == (B, 1)
        assert jnp.allclose(out, ref, atol=1e-5, rtol=1e-5)

    # --- multi-tile grid with a partial last block (no host-side padding) ---
    Bn = 20
    xs_big = jax.random.split(kbig, 4)
    xs_big = [jax.random.normal(k, (Bn, IN_FEATURES), jnp.float32) for k in xs_big]
    out_big = jax.block_until_ready(
        fc_sigmoid_heads(tuple(xs_big), model._w_stack, model._b_stack, block_b=8))
    assert out_big.shape == (Bn, 4)
    for h, name in enumerate(names):
        w, b = model.params[name]
        ref = _ref_fc_sigmoid(xs_big[h], w, b)
        assert jnp.allclose(out_big[:, h:h + 1], ref, atol=1e-5, rtol=1e-5)

    # --- eval-mode path, batch not a multiple of 8 (partial single block) ---
    Be = 5
    xe = jax.random.normal(kxe, (Be, IN_FEATURES), jnp.float32)
    y_eval = jax.block_until_ready(model.eval()(xe))
    w0, b0 = model.params["fc1"]
    assert y_eval.shape == (Be, 1)
    assert jnp.allclose(y_eval, _ref_fc_sigmoid(xe, w0, b0), atol=1e-5, rtol=1e-5)

    print("KERNEL_OK")
</pallas_src>

<mosaic_0001>
module attributes {stable_mosaic.version = 11 : i64} {
  func.func @kernel(%arg0: i32, %arg1: memref<8x512xf32, #tpu.memory_space<vmem>>, %arg2: memref<8x512xf32, #tpu.memory_space<vmem>>, %arg3: memref<8x512xf32, #tpu.memory_space<vmem>>, %arg4: memref<8x512xf32, #tpu.memory_space<vmem>>, %arg5: memref<4x512xf32, #tpu.memory_space<vmem>>, %arg6: memref<4xf32, #tpu.memory_space<smem>>, %arg7: memref<8x4xf32, #tpu.memory_space<vmem>>) attributes {dimension_semantics = [#tpu.dimension_semantics<parallel>], iteration_bounds = array<i64: 1>, scalar_prefetch = 0 : i64, scratch_operands = 0 : i64, tpu.core_type = #tpu.core_type<tc>, window_params = [{transform_indices = @transform_0, window_bounds = array<i64: 8, 512>}, {transform_indices = @transform_1, window_bounds = array<i64: 8, 512>}, {transform_indices = @transform_2, window_bounds = array<i64: 8, 512>}, {transform_indices = @transform_3, window_bounds = array<i64: 8, 512>}, {pipeline_mode = #tpu.pipeline_mode<synchronous>, transform_indices = @transform_4, window_bounds = array<i64: 4, 512>}, {transform_indices = @transform_5, window_bounds = array<i64: 4>}, {transform_indices = @transform_6, window_bounds = array<i64: 8, 4>}]} {
    %c0 = arith.constant 0 : index
    %c0_0 = arith.constant 0 : index
    %0 = vector.load %arg5[%c0, %c0_0] : memref<4x512xf32, #tpu.memory_space<vmem>>, vector<4x512xf32>
    %1 = tpu.iota {dimensions = array<i32: 1>} : vector<1x4xi32>
    %cst = arith.constant 0.000000e+00 : f32
    %2 = vector.broadcast %cst : f32 to vector<8x4xf32>
    %c0_1 = arith.constant 0 : index
    %c0_2 = arith.constant 0 : index
    %3 = vector.load %arg1[%c0_1, %c0_2] : memref<8x512xf32, #tpu.memory_space<vmem>>, vector<8x512xf32>
    %cst_3 = arith.constant dense<0.000000e+00> : vector<8x4xf32>
    %4 = tpu.matmul %3, %0, %cst_3 {dimension_numbers = #tpu.dot_dimension_numbers<[1], [1], [0], [0], [0, 0, 1, 0], [], []>} : vector<8x512xf32>, vector<4x512xf32>, vector<8x4xf32> -> vector<8x4xf32>
    %c0_i32 = arith.constant 0 : i32
    %5 = vector.broadcast %c0_i32 : i32 to vector<1x4xi32>
    %6 = arith.cmpi eq, %1, %5 : vector<1x4xi32>
    %c0_4 = arith.constant 0 : index
    %7 = memref.load %arg6[%c0_4] : memref<4xf32, #tpu.memory_space<smem>>
    %8 = vector.broadcast %7 : f32 to vector<8x4xf32>
    %9 = arith.addf %4, %8 : vector<8x4xf32>
    %cst_5 = arith.constant 0.000000e+00 : f32
    %10 = vector.shape_cast %6 : vector<1x4xi1> to vector<1x4xi1>
    %11 = vector.broadcast %10 : vector<1x4xi1> to vector<8x4xi1>
    %12 = vector.broadcast %cst_5 : f32 to vector<8x4xf32>
    %13 = arith.select %11, %9, %12 : vector<8x4xi1>, vector<8x4xf32>
    %14 = arith.addf %2, %13 : vector<8x4xf32>
    %c0_6 = arith.constant 0 : index
    %c0_7 = arith.constant 0 : index
    %15 = vector.load %arg2[%c0_6, %c0_7] : memref<8x512xf32, #tpu.memory_space<vmem>>, vector<8x512xf32>
    %cst_8 = arith.constant dense<0.000000e+00> : vector<8x4xf32>
    %16 = tpu.matmul %15, %0, %cst_8 {dimension_numbers = #tpu.dot_dimension_numbers<[1], [1], [0], [0], [0, 0, 1, 0], [], []>} : vector<8x512xf32>, vector<4x512xf32>, vector<8x4xf32> -> vector<8x4xf32>
    %c1_i32 = arith.constant 1 : i32
    %17 = vector.broadcast %c1_i32 : i32 to vector<1x4xi32>
    %18 = arith.cmpi eq, %1, %17 : vector<1x4xi32>
    %c1 = arith.constant 1 : index
    %19 = memref.load %arg6[%c1] : memref<4xf32, #tpu.memory_space<smem>>
    %20 = vector.broadcast %19 : f32 to vector<8x4xf32>
    %21 = arith.addf %16, %20 : vector<8x4xf32>
    %cst_9 = arith.constant 0.000000e+00 : f32
    %22 = vector.shape_cast %18 : vector<1x4xi1> to vector<1x4xi1>
    %23 = vector.broadcast %22 : vector<1x4xi1> to vector<8x4xi1>
    %24 = vector.broadcast %cst_9 : f32 to vector<8x4xf32>
    %25 = arith.select %23, %21, %24 : vector<8x4xi1>, vector<8x4xf32>
    %26 = arith.addf %14, %25 : vector<8x4xf32>
    %c0_10 = arith.constant 0 : index
    %c0_11 = arith.constant 0 : index
    %27 = vector.load %arg3[%c0_10, %c0_11] : memref<8x512xf32, #tpu.memory_space<vmem>>, vector<8x512xf32>
    %cst_12 = arith.constant dense<0.000000e+00> : vector<8x4xf32>
    %28 = tpu.matmul %27, %0, %cst_12 {dimension_numbers = #tpu.dot_dimension_numbers<[1], [1], [0], [0], [0, 0, 1, 0], [], []>} : vector<8x512xf32>, vector<4x512xf32>, vector<8x4xf32> -> vector<8x4xf32>
    %c2_i32 = arith.constant 2 : i32
    %29 = vector.broadcast %c2_i32 : i32 to vector<1x4xi32>
    %30 = arith.cmpi eq, %1, %29 : vector<1x4xi32>
    %c2 = arith.constant 2 : index
    %31 = memref.load %arg6[%c2] : memref<4xf32, #tpu.memory_space<smem>>
    %32 = vector.broadcast %31 : f32 to vector<8x4xf32>
    %33 = arith.addf %28, %32 : vector<8x4xf32>
    %cst_13 = arith.constant 0.000000e+00 : f32
    %34 = vector.shape_cast %30 : vector<1x4xi1> to vector<1x4xi1>
    %35 = vector.broadcast %34 : vector<1x4xi1> to vector<8x4xi1>
    %36 = vector.broadcast %cst_13 : f32 to vector<8x4xf32>
    %37 = arith.select %35, %33, %36 : vector<8x4xi1>, vector<8x4xf32>
    %38 = arith.addf %26, %37 : vector<8x4xf32>
    %c0_14 = arith.constant 0 : index
    %c0_15 = arith.constant 0 : index
    %39 = vector.load %arg4[%c0_14, %c0_15] : memref<8x512xf32, #tpu.memory_space<vmem>>, vector<8x512xf32>
    %cst_16 = arith.constant dense<0.000000e+00> : vector<8x4xf32>
    %40 = tpu.matmul %39, %0, %cst_16 {dimension_numbers = #tpu.dot_dimension_numbers<[1], [1], [0], [0], [0, 0, 1, 0], [], []>} : vector<8x512xf32>, vector<4x512xf32>, vector<8x4xf32> -> vector<8x4xf32>
    %c3_i32 = arith.constant 3 : i32
    %41 = vector.broadcast %c3_i32 : i32 to vector<1x4xi32>
    %42 = arith.cmpi eq, %1, %41 : vector<1x4xi32>
    %c3 = arith.constant 3 : index
    %43 = memref.load %arg6[%c3] : memref<4xf32, #tpu.memory_space<smem>>
    %44 = vector.broadcast %43 : f32 to vector<8x4xf32>
    %45 = arith.addf %40, %44 : vector<8x4xf32>
    %cst_17 = arith.constant 0.000000e+00 : f32
    %46 = vector.shape_cast %42 : vector<1x4xi1> to vector<1x4xi1>
    %47 = vector.broadcast %46 : vector<1x4xi1> to vector<8x4xi1>
    %48 = vector.broadcast %cst_17 : f32 to vector<8x4xf32>
    %49 = arith.select %47, %45, %48 : vector<8x4xi1>, vector<8x4xf32>
    %50 = arith.addf %38, %49 : vector<8x4xf32>
    %51 = arith.negf %50 : vector<8x4xf32>
    %52 = math.exp %51 : vector<8x4xf32>
    %cst_18 = arith.constant 1.000000e+00 : f32
    %53 = vector.broadcast %cst_18 : f32 to vector<8x4xf32>
    %54 = arith.addf %53, %52 : vector<8x4xf32>
    %55 = arith.divf %53, %54 : vector<8x4xf32>
    %c0_19 = arith.constant 0 : index
    %c0_20 = arith.constant 0 : index
    %56 = vector.load %arg7[%c0_19, %c0_20] : memref<8x4xf32, #tpu.memory_space<vmem>>, vector<8x4xf32>
    tpu.vector_store %arg7[%c0_19, %c0_20], %55 {strides = array<i32>} : memref<8x4xf32, #tpu.memory_space<vmem>>, vector<8x4xf32>,
    return
  }
  func.func @transform_0(%arg0: i32) -> (i32, i32) {
    %c0_i32 = arith.constant 0 : i32
    %c0_i32_0 = arith.constant 0 : i32
    return %arg0, %c0_i32 : i32, i32
  }
  func.func @transform_1(%arg0: i32) -> (i32, i32) {
    %c0_i32 = arith.constant 0 : i32
    %c0_i32_0 = arith.constant 0 : i32
    return %arg0, %c0_i32 : i32, i32
  }
  func.func @transform_2(%arg0: i32) -> (i32, i32) {
    %c0_i32 = arith.constant 0 : i32
    %c0_i32_0 = arith.constant 0 : i32
    return %arg0, %c0_i32 : i32, i32
  }
  func.func @transform_3(%arg0: i32) -> (i32, i32) {
    %c0_i32 = arith.constant 0 : i32
    %c0_i32_0 = arith.constant 0 : i32
    return %arg0, %c0_i32 : i32, i32
  }
  func.func @transform_4(%arg0: i32) -> (i32, i32) {
    %c0_i32 = arith.constant 0 : i32
    %c0_i32_0 = arith.constant 0 : i32
    %c0_i32_1 = arith.constant 0 : i32
    return %c0_i32, %c0_i32_0 : i32, i32
  }
  func.func @transform_5(%arg0: i32) -> i32 {
    %c0_i32 = arith.constant 0 : i32
    %c0_i32_0 = arith.constant 0 : i32
    return %c0_i32 : i32
  }
  func.func @transform_6(%arg0: i32) -> (i32, i32) {
    %c0_i32 = arith.constant 0 : i32
    %c0_i32_0 = arith.constant 0 : i32
    return %arg0, %c0_i32 : i32, i32
  }
}

</mosaic_0001>

<llo_original>
// kernel: fc_sigmoid_heads.1
$region0: #{fc_sigmoid_heads.1}
  #allocation0 [shape = 'u32[]', space=smem, size = 0x4, offset = 0x4, fixed_abs, tag = 'smem constant byte address 0x4 - core index']
  #allocation1 [shape = 'u32[144,128]{1,0:T(1,128)}', space=vmem, size = 0x12000, scoped, tag = 'internal scratch']
  %s0 = inlined_call_operand.hbm [shape: f32[8,512], index: 0, kind: input, shape index: {}]
  %s1 = inlined_call_operand.hbm [shape: f32[8,512], index: 1, kind: input, shape index: {}]
  %s2 = inlined_call_operand.hbm [shape: f32[8,512], index: 2, kind: input, shape index: {}]
  %s3 = inlined_call_operand.hbm [shape: f32[8,512], index: 3, kind: input, shape index: {}]
  %s4 = inlined_call_operand.hbm [shape: f32[4,512], index: 4, kind: input, shape index: {}]
  %s5 = inlined_call_operand.vmem [shape: f32[4], index: 5, kind: input, shape index: {}]
  %s6 = inlined_call_operand.vmem [shape: f32[8,4], index: 6, kind: output, shape index: {}]
  %s7 = sld [smem:[#allocation0]]
  $region58: #{fc_sigmoid_heads.1} parent=0
    _
  %s9 = ssub.s32 1, %s7
  %s10 = scalar_select 0, %s9, %s7
  $region1: #{fc_sigmoid_heads.1} parent=0
    #allocation2 [shape = 'u8[16384]{0}', space=vmem, size = 0x4000, scoped, tag = 'input window, operand 0, single buffered']
    #allocation3 [shape = 's32[1]{0}', space=sflag, size = 0x4, scoped, tag = 'scoped memory for fc_sigmoid_heads.1']
    #allocation4 [shape = 's32[1]{0}', space=sflag, size = 0x4, scoped, tag = 'scoped memory for fc_sigmoid_heads.1']
    #allocation5 [shape = 'u8[16384]{0}', space=vmem, size = 0x4000, scoped, tag = 'input window, operand 1, single buffered']
    #allocation6 [shape = 's32[1]{0}', space=sflag, size = 0x4, scoped, tag = 'scoped memory for fc_sigmoid_heads.1']
    #allocation7 [shape = 'u8[16384]{0}', space=vmem, size = 0x4000, scoped, tag = 'input window, operand 2, single buffered']
    #allocation8 [shape = 'u8[16384]{0}', space=vmem, size = 0x4000, scoped, tag = 'input window, operand 3, single buffered']
    #allocation9 [shape = 's32[1]{0}', space=sflag, size = 0x4, scoped, tag = 'scoped memory for fc_sigmoid_heads.1']
    #allocation10 [shape = 'u8[8192]{0}', space=vmem, size = 0x2000, scoped, tag = 'input window, operand 4, single buffered']
    #allocation11 [shape = 'u8[512]{0}', space=smem, size = 0x200, scoped, tag = 'input window, operand 5, single buffered']
    %11 = vsyncpa [#allocation3], 0
    %12 = vsyncpa [#allocation6], 0
    %13 = vsyncpa [#allocation9], 0
    %14 = vsyncpa [#allocation4], 0
    // Predicated region
    $region2: #{fc_sigmoid_heads.1} parent=1 // pred_check
      _
    $region3: #{fc_sigmoid_heads.1} parent=1 // pred_check_branch
      %16 = sbr.rel (0) target = $region5
    $region4: #{fc_sigmoid_heads.1} parent=1 // pred_region
      %s18 = ssub.s32 512, 512
      %19 = vsyncadd [#allocation3], %s18
      %s21 = sshll.u32 [#allocation2], 4
      %s22 = int_to_ptr.vmem [resolvable:$true] %s21
      %24 = dma.hbm_to_vmem [thread:$0]  %s0, 512, %s22, [#allocation3]
    $region5: #{fc_sigmoid_heads.1} parent=1 // pred_fallthru
      _
    // Predicated region
    $region6: #{fc_sigmoid_heads.1} parent=1 // pred_check
      _
    $region7: #{fc_sigmoid_heads.1} parent=1 // pred_check_branch
      %26 = sbr.rel (0) target = $region9
    $region8: #{fc_sigmoid_heads.1} parent=1 // pred_region
      %s28 = ssub.s32 512, 512
      %29 = vsyncadd [#allocation6], %s28
      %s31 = sshll.u32 [#allocation5], 4
      %s32 = int_to_ptr.vmem [resolvable:$true] %s31
      %34 = dma.hbm_to_vmem [thread:$0]  %s1, 512, %s32, [#allocation6]
    $region9: #{fc_sigmoid_heads.1} parent=1 // pred_fallthru
      _
    // Predicated region
    $region10: #{fc_sigmoid_heads.1} parent=1 // pred_check
      _
    $region11: #{fc_sigmoid_heads.1} parent=1 // pred_check_branch
      %36 = sbr.rel (0) target = $region13
    $region12: #{fc_sigmoid_heads.1} parent=1 // pred_region
      %s38 = ssub.s32 512, 512
      %39 = vsyncadd [#allocation6], %s38
      %s41 = sshll.u32 [#allocation7], 4
      %s42 = int_to_ptr.vmem [resolvable:$true] %s41
      %44 = dma.hbm_to_vmem [thread:$0]  %s2, 512, %s42, [#allocation6]
    $region13: #{fc_sigmoid_heads.1} parent=1 // pred_fallthru
      _
    // Predicated region
    $region14: #{fc_sigmoid_heads.1} parent=1 // pred_check
      _
    $region15: #{fc_sigmoid_heads.1} parent=1 // pred_check_branch
      %46 = sbr.rel (0) target = $region17
    $region16: #{fc_sigmoid_heads.1} parent=1 // pred_region
      %s48 = ssub.s32 512, 512
      %49 = vsyncadd [#allocation9], %s48
      %s51 = sshll.u32 [#allocation8], 4
      %s52 = int_to_ptr.vmem [resolvable:$true] %s51
      %54 = dma.hbm_to_vmem [thread:$0]  %s3, 512, %s52, [#allocation9]
    $region17: #{fc_sigmoid_heads.1} parent=1 // pred_fallthru
      _
    // Predicated region
    $region18: #{fc_sigmoid_heads.1} parent=1 // pred_check
      _
    $region19: #{fc_sigmoid_heads.1} parent=1 // pred_check_branch
      %56 = sbr.rel (0) target = $region21
    $region20: #{fc_sigmoid_heads.1} parent=1 // pred_region
      %s58 = ssub.s32 256, 256
      %59 = vsyncadd [#allocation9], %s58
      %s61 = sshll.u32 [#allocation10], 4
      %s62 = int_to_ptr.vmem [resolvable:$true] %s61
      %64 = dma.hbm_to_vmem [thread:$0]  %s4, 256, %s62, [#allocation9]
    $region21: #{fc_sigmoid_heads.1} parent=1 // pred_fallthru
      _
    // Predicated region
    $region22: #{fc_sigmoid_heads.1} parent=1 // pred_check
      _
    $region23: #{fc_sigmoid_heads.1} parent=1 // pred_check_branch
      %66 = sbr.rel (0) target = $region25
    $region24: #{fc_sigmoid_heads.1} parent=1 // pred_region
      %s68 = ssub.s32 16, 16
      %69 = vsyncadd [#allocation4], %s68
      %s71 = sshll.u32 %s5, 4
      %s72 = int_to_ptr.vmem [resolvable:$true] %s71
      %74 = dma.vmem_to_smem %s72, 16, [#allocation11], [#allocation4]
    $region25: #{fc_sigmoid_heads.1} parent=1 // pred_fallthru
      _
    // Predicated region
    $region26: #{fc_sigmoid_heads.1} parent=1 // pred_check
      _
    $region27: #{fc_sigmoid_heads.1} parent=1 // pred_check_branch
      %76 = sbr.rel (0) target = $region29
    $region28: #{fc_sigmoid_heads.1} parent=1 // pred_region
      %77 = dma.done [#allocation3], 512
    $region29: #{fc_sigmoid_heads.1} parent=1 // pred_fallthru
      _
    // Predicated region
    $region30: #{fc_sigmoid_heads.1} parent=1 // pred_check
      _
    $region31: #{fc_sigmoid_heads.1} parent=1 // pred_check_branch
      %79 = sbr.rel (0) target = $region33
    $region32: #{fc_sigmoid_heads.1} parent=1 // pred_region
      %80 = dma.done [#allocation6], 512
    $region33: #{fc_sigmoid_heads.1} parent=1 // pred_fallthru
      _
    // Predicated region
    $region34: #{fc_sigmoid_heads.1} parent=1 // pred_check
      _
    $region35: #{fc_sigmoid_heads.1} parent=1 // pred_check_branch
      %82 = sbr.rel (0) target = $region37
    $region36: #{fc_sigmoid_heads.1} parent=1 // pred_region
      %83 = dma.done [#allocation6], 512
    $region37: #{fc_sigmoid_heads.1} parent=1 // pred_fallthru
      _
    // Predicated region
    $region38: #{fc_sigmoid_heads.1} parent=1 // pred_check
      _
    $region39: #{fc_sigmoid_heads.1} parent=1 // pred_check_branch
      %85 = sbr.rel (0) target = $region41
    $region40: #{fc_sigmoid_heads.1} parent=1 // pred_region
      %86 = dma.done [#allocation9], 512
    $region41: #{fc_sigmoid_heads.1} parent=1 // pred_fallthru
      _
    // Predicated region
    $region42: #{fc_sigmoid_heads.1} parent=1 // pred_check
      _
    $region43: #{fc_sigmoid_heads.1} parent=1 // pred_check_branch
      %88 = sbr.rel (0) target = $region45
    $region44: #{fc_sigmoid_heads.1} parent=1 // pred_region
      %89 = dma.done [#allocation9], 256
    $region45: #{fc_sigmoid_heads.1} parent=1 // pred_fallthru
      _
    // Predicated region
    $region46: #{fc_sigmoid_heads.1} parent=1 // pred_check
      _
    $region47: #{fc_sigmoid_heads.1} parent=1 // pred_check_branch
      %91 = sbr.rel (0) target = $region49
    $region48: #{fc_sigmoid_heads.1} parent=1 // pred_region
      %92 = dma.done [#allocation4], 16
    $region49: #{fc_sigmoid_heads.1} parent=1 // pred_fallthru
      _
    %93 = sfence
    %v94 = vld [vmem:[#allocation10] sm:$0xff]
    %v95 = vld [vmem:[#allocation10 + $0x8] sm:$0xff]
    %v96 = vlaneseq
    %v97 = vand.u32 %v96, 127
    %v98 = vld [vmem:[#allocation2] sm:$0xff]
    %v99 = vld [vmem:[#allocation2 + $0x8] sm:$0xff]
    %v100 = vld [vmem:[#allocation2 + $0x10] sm:$0xff]
    %v101 = vld [vmem:[#allocation2 + $0x18] sm:$0xff]
    %vm102 = vcmp.eq.s32.totalorder %v97, 0
    %s103 = sld [smem:[#allocation11]]
    %v104 = vstv %s103
    %v107 = vcombine.high %v94, %v94
    %v108 = vcombine.high %v95, %v95
    %111 = vmatprep.subr.mxu0 0.0
    %112 = vmatpush1.xpose.msra.mxu0 0.0
    %113 = vmatprep.subr.mxu0 0.0
    %114 = vmatpush1.xpose.msra.mxu0 0.0
    %115 = vmatprep.subr.mxu0 0.0
    %116 = vmatpush1.xpose.msra.mxu0 0.0
    %117 = vmatprep.subr.mxu0 0.0
    %118 = vmatpush1.xpose.msra.mxu0 0.0
    %119 = vmatprep.subr.mxu0 0.0
    %120 = vmatpush1.xpose.msra.mxu0 0.0
    %121 = vmatprep.subr.mxu0 0.0
    %122 = vmatpush1.xpose.msra.mxu0 0.0
    %123 = vmatprep.subr.mxu0 0.0
    %124 = vmatpush1.xpose.msra.mxu0 0.0
    %125 = vmatprep.subr.mxu0 0.0
    %126 = vmatpush1.xpose.msra.mxu0 0.0
    %127 = vmatprep.subr.mxu0 0.0
    %128 = vmatpush1.xpose.msra.mxu0 0.0
    %129 = vmatprep.subr.mxu0 0.0
    %130 = vmatpush1.xpose.msra.mxu0 0.0
    %131 = vmatprep.subr.mxu0 0.0
    %132 = vmatpush1.xpose.msra.mxu0 0.0
    %133 = vmatprep.subr.mxu0 0.0
    %134 = vmatpush1.xpose.msra.mxu0 0.0
    %135 = vmatprep.subr.mxu0 0.0
    %136 = vmatpush1.xpose.msra.mxu0 0.0
    %137 = vmatprep.subr.mxu0 0.0
    %138 = vmatpush1.xpose.msra.mxu0 0.0
    %139 = vmatprep.subr.mxu0 0.0
    %140 = vmatpush1.xpose.msra.mxu0 0.0
    %141 = vmatprep.subr.mxu0 %v107
    %142 = vmatpush1.xpose.msra.mxu0 %v94
    %143 = vmatprep.subr.mxu0 0.0
    %144 = vmatpush2.xpose.msra.mxu0 0.0
    %145 = vmatprep.subr.mxu0 0.0
    %146 = vmatpush2.xpose.msra.mxu0 0.0
    %147 = vmatprep.subr.mxu0 0.0
    %148 = vmatpush2.xpose.msra.mxu0 0.0
    %149 = vmatprep.subr.mxu0 0.0
    %150 = vmatpush2.xpose.msra.mxu0 0.0
    %151 = vmatprep.subr.mxu0 0.0
    %152 = vmatpush2.xpose.msra.mxu0 0.0
    %153 = vmatprep.subr.mxu0 0.0
    %154 = vmatpush2.xpose.msra.mxu0 0.0
    %155 = vmatprep.subr.mxu0 0.0
    %156 = vmatpush2.xpose.msra.mxu0 0.0
    %157 = vmatprep.subr.mxu0 0.0
    %158 = vmatpush2.xpose.msra.mxu0 0.0
    %159 = vmatprep.subr.mxu0 0.0
    %160 = vmatpush2.xpose.msra.mxu0 0.0
    %161 = vmatprep.subr.mxu0 0.0
    %162 = vmatpush2.xpose.msra.mxu0 0.0
    %163 = vmatprep.subr.mxu0 0.0
    %164 = vmatpush2.xpose.msra.mxu0 0.0
    %165 = vmatprep.subr.mxu0 0.0
    %166 = vmatpush2.xpose.msra.mxu0 0.0
    %167 = vmatprep.subr.mxu0 0.0
    %168 = vmatpush2.xpose.msra.mxu0 0.0
    %169 = vmatprep.subr.mxu0 0.0
    %170 = vmatpush2.xpose.msra.mxu0 0.0
    %171 = vmatprep.subr.mxu0 0.0
    %172 = vmatpush2.xpose.msra.mxu0 0.0
    %173 = vmatprep.subr.mxu0 0.0
    %174 = vmatpush2.xpose.msra.mxu0 0.0
    %175 = vmatprep.mubr.f32.mxu0 %v99
    %176 = vmatmul.mubr.f32.gmra.mxu0 %v98
    %v177 = vpop.f32.mrf.mxu0
    %v178 = vadd.f32 %v104, %v177
    %v179 = vpop.f32.mrf.mxu0
    %180 = vdwg.mxu0
    %181 = vmatprep.subr.mxu0 0.0
    %182 = vmatpush1.xpose.msra.mxu0 0.0
    %183 = vmatprep.subr.mxu0 0.0
    %184 = vmatpush1.xpose.msra.mxu0 0.0
    %185 = vmatprep.subr.mxu0 0.0
    %186 = vmatpush1.xpose.msra.mxu0 0.0
    %187 = vmatprep.subr.mxu0 0.0
    %188 = vmatpush1.xpose.msra.mxu0 0.0
    %189 = vmatprep.subr.mxu0 0.0
    %190 = vmatpush1.xpose.msra.mxu0 0.0
    %191 = vmatprep.subr.mxu0 0.0
    %192 = vmatpush1.xpose.msra.mxu0 0.0
    %193 = vmatprep.subr.mxu0 0.0
    %194 = vmatpush1.xpose.msra.mxu0 0.0
    %195 = vmatprep.subr.mxu0 0.0
    %196 = vmatpush1.xpose.msra.mxu0 0.0
    %197 = vmatprep.subr.mxu0 0.0
    %198 = vmatpush1.xpose.msra.mxu0 0.0
    %199 = vmatprep.subr.mxu0 0.0
    %200 = vmatpush1.xpose.msra.mxu0 0.0
    %201 = vmatprep.subr.mxu0 0.0
    %202 = vmatpush1.xpose.msra.mxu0 0.0
    %203 = vmatprep.subr.mxu0 0.0
    %204 = vmatpush1.xpose.msra.mxu0 0.0
    %205 = vmatprep.subr.mxu0 0.0
    %206 = vmatpush1.xpose.msra.mxu0 0.0
    %207 = vmatprep.subr.mxu0 0.0
    %208 = vmatpush1.xpose.msra.mxu0 0.0
    %209 = vmatprep.subr.mxu0 0.0
    %210 = vmatpush1.xpose.msra.mxu0 0.0
    %211 = vmatprep.subr.mxu0 %v108
    %212 = vmatpush1.xpose.msra.mxu0 %v95
    %213 = vmatprep.subr.mxu0 0.0
    %214 = vmatpush2.xpose.msra.mxu0 0.0
    %215 = vmatprep.subr.mxu0 0.0
    %216 = vmatpush2.xpose.msra.mxu0 0.0
    %217 = vmatprep.subr.mxu0 0.0
    %218 = vmatpush2.xpose.msra.mxu0 0.0
    %219 = vmatprep.subr.mxu0 0.0
    %220 = vmatpush2.xpose.msra.mxu0 0.0
    %221 = vmatprep.subr.mxu0 0.0
    %222 = vmatpush2.xpose.msra.mxu0 0.0
    %223 = vmatprep.subr.mxu0 0.0
    %224 = vmatpush2.xpose.msra.mxu0 0.0
    %225 = vmatprep.subr.mxu0 0.0
    %226 = vmatpush2.xpose.msra.mxu0 0.0
    %227 = vmatprep.subr.mxu0 0.0
    %228 = vmatpush2.xpose.msra.mxu0 0.0
    %229 = vmatprep.subr.mxu0 0.0
    %230 = vmatpush2.xpose.msra.mxu0 0.0
    %231 = vmatprep.subr.mxu0 0.0
    %232 = vmatpush2.xpose.msra.mxu0 0.0
    %233 = vmatprep.subr.mxu0 0.0
    %234 = vmatpush2.xpose.msra.mxu0 0.0
    %235 = vmatprep.subr.mxu0 0.0
    %236 = vmatpush2.xpose.msra.mxu0 0.0
    %237 = vmatprep.subr.mxu0 0.0
    %238 = vmatpush2.xpose.msra.mxu0 0.0
    %239 = vmatprep.subr.mxu0 0.0
    %240 = vmatpush2.xpose.msra.mxu0 0.0
    %241 = vmatprep.subr.mxu0 0.0
    %242 = vmatpush2.xpose.msra.mxu0 0.0
    %243 = vmatprep.subr.mxu0 0.0
    %244 = vmatpush2.xpose.msra.mxu0 0.0
    %245 = vmatprep.mubr.f32.mxu0 %v101
    %246 = vmatmul.mubr.f32.gmra.mxu0 %v100
    %v247 = vpop.f32.mrf.mxu0
    %v248 = vadd.f32 %v178, %v247
    %v249 = vpop.f32.mrf.mxu0
    %250 = vdwg.mxu0
    %v251 = vsel %vm102, 1, 0
    %vm252 = vcmp.eq.s32.totalorder %v251, 1
    %v253 = vsel %vm252, %v248, 0.0
    %v254 = vadd.f32 %v253, 0.0
    %v255 = vld [vmem:[#allocation5] sm:$0xff]
    %v256 = vld [vmem:[#allocation5 + $0x8] sm:$0xff]
    %v257 = vld [vmem:[#allocation5 + $0x10] sm:$0xff]
    %v258 = vld [vmem:[#allocation5 + $0x18] sm:$0xff]
    %vm259 = vcmp.eq.s32.totalorder %v97, 1
    %s260 = sld [smem:[#allocation11 + $0x1]]
    %v261 = vstv %s260
    %262 = vmatprep.subr.mxu0 0.0
    %263 = vmatpush1.xpose.msra.mxu0 0.0
    %264 = vmatprep.subr.mxu0 0.0
    %265 = vmatpush1.xpose.msra.mxu0 0.0
    %266 = vmatprep.subr.mxu0 0.0
    %267 = vmatpush1.xpose.msra.mxu0 0.0
    %268 = vmatprep.subr.mxu0 0.0
    %269 = vmatpush1.xpose.msra.mxu0 0.0
    %270 = vmatprep.subr.mxu0 0.0
    %271 = vmatpush1.xpose.msra.mxu0 0.0
    %272 = vmatprep.subr.mxu0 0.0
    %273 = vmatpush1.xpose.msra.mxu0 0.0
    %274 = vmatprep.subr.mxu0 0.0
    %275 = vmatpush1.xpose.msra.mxu0 0.0
    %276 = vmatprep.subr.mxu0 0.0
    %277 = vmatpush1.xpose.msra.mxu0 0.0
    %278 = vmatprep.subr.mxu0 0.0
    %279 = vmatpush1.xpose.msra.mxu0 0.0
    %280 = vmatprep.subr.mxu0 0.0
    %281 = vmatpush1.xpose.msra.mxu0 0.0
    %282 = vmatprep.subr.mxu0 0.0
    %283 = vmatpush1.xpose.msra.mxu0 0.0
    %284 = vmatprep.subr.mxu0 0.0
    %285 = vmatpush1.xpose.msra.mxu0 0.0
    %286 = vmatprep.subr.mxu0 0.0
    %287 = vmatpush1.xpose.msra.mxu0 0.0
    %288 = vmatprep.subr.mxu0 0.0
    %289 = vmatpush1.xpose.msra.mxu0 0.0
    %290 = vmatprep.subr.mxu0 0.0
    %291 = vmatpush1.xpose.msra.mxu0 0.0
    %292 = vmatprep.subr.mxu0 %v107
    %293 = vmatpush1.xpose.msra.mxu0 %v94
    %294 = vmatprep.subr.mxu0 0.0
    %295 = vmatpush2.xpose.msra.mxu0 0.0
    %296 = vmatprep.subr.mxu0 0.0
    %297 = vmatpush2.xpose.msra.mxu0 0.0
    %298 = vmatprep.subr.mxu0 0.0
    %299 = vmatpush2.xpose.msra.mxu0 0.0
    %300 = vmatprep.subr.mxu0 0.0
    %301 = vmatpush2.xpose.msra.mxu0 0.0
    %302 = vmatprep.subr.mxu0 0.0
    %303 = vmatpush2.xpose.msra.mxu0 0.0
    %304 = vmatprep.subr.mxu0 0.0
    %305 = vmatpush2.xpose.msra.mxu0 0.0
    %306 = vmatprep.subr.mxu0 0.0
    %307 = vmatpush2.xpose.msra.mxu0 0.0
    %308 = vmatprep.subr.mxu0 0.0
    %309 = vmatpush2.xpose.msra.mxu0 0.0
    %310 = vmatprep.subr.mxu0 0.0
    %311 = vmatpush2.xpose.msra.mxu0 0.0
    %312 = vmatprep.subr.mxu0 0.0
    %313 = vmatpush2.xpose.msra.mxu0 0.0
    %314 = vmatprep.subr.mxu0 0.0
    %315 = vmatpush2.xpose.msra.mxu0 0.0
    %316 = vmatprep.subr.mxu0 0.0
    %317 = vmatpush2.xpose.msra.mxu0 0.0
    %318 = vmatprep.subr.mxu0 0.0
    %319 = vmatpush2.xpose.msra.mxu0 0.0
    %320 = vmatprep.subr.mxu0 0.0
    %321 = vmatpush2.xpose.msra.mxu0 0.0
    %322 = vmatprep.subr.mxu0 0.0
    %323 = vmatpush2.xpose.msra.mxu0 0.0
    %324 = vmatprep.subr.mxu0 0.0
    %325 = vmatpush2.xpose.msra.mxu0 0.0
    %326 = vmatprep.mubr.f32.mxu0 %v256
    %327 = vmatmul.mubr.f32.gmra.mxu0 %v255
    %v328 = vpop.f32.mrf.mxu0
    %v329 = vadd.f32 %v261, %v328
    %v330 = vpop.f32.mrf.mxu0
    %331 = vdwg.mxu0
    %332 = vmatprep.subr.mxu0 0.0
    %333 = vmatpush1.xpose.msra.mxu0 0.0
    %334 = vmatprep.subr.mxu0 0.0
    %335 = vmatpush1.xpose.msra.mxu0 0.0
    %336 = vmatprep.subr.mxu0 0.0
    %337 = vmatpush1.xpose.msra.mxu0 0.0
    %338 = vmatprep.subr.mxu0 0.0
    %339 = vmatpush1.xpose.msra.mxu0 0.0
    %340 = vmatprep.subr.mxu0 0.0
    %341 = vmatpush1.xpose.msra.mxu0 0.0
    %342 = vmatprep.subr.mxu0 0.0
    %343 = vmatpush1.xpose.msra.mxu0 0.0
    %344 = vmatprep.subr.mxu0 0.0
    %345 = vmatpush1.xpose.msra.mxu0 0.0
    %346 = vmatprep.subr.mxu0 0.0
    %347 = vmatpush1.xpose.msra.mxu0 0.0
    %348 = vmatprep.subr.mxu0 0.0
    %349 = vmatpush1.xpose.msra.mxu0 0.0
    %350 = vmatprep.subr.mxu0 0.0
    %351 = vmatpush1.xpose.msra.mxu0 0.0
    %352 = vmatprep.subr.mxu0 0.0
    %353 = vmatpush1.xpose.msra.mxu0 0.0
    %354 = vmatprep.subr.mxu0 0.0
    %355 = vmatpush1.xpose.msra.mxu0 0.0
    %356 = vmatprep.subr.mxu0 0.0
    %357 = vmatpush1.xpose.msra.mxu0 0.0
    %358 = vmatprep.subr.mxu0 0.0
    %359 = vmatpush1.xpose.msra.mxu0 0.0
    %360 = vmatprep.subr.mxu0 0.0
    %361 = vmatpush1.xpose.msra.mxu0 0.0
    %362 = vmatprep.subr.mxu0 %v108
    %363 = vmatpush1.xpose.msra.mxu0 %v95
    %364 = vmatprep.subr.mxu0 0.0
    %365 = vmatpush2.xpose.msra.mxu0 0.0
    %366 = vmatprep.subr.mxu0 0.0
    %367 = vmatpush2.xpose.msra.mxu0 0.0
    %368 = vmatprep.subr.mxu0 0.0
    %369 = vmatpush2.xpose.msra.mxu0 0.0
    %370 = vmatprep.subr.mxu0 0.0
    %371 = vmatpush2.xpose.msra.mxu0 0.0
    %372 = vmatprep.subr.mxu0 0.0
    %373 = vmatpush2.xpose.msra.mxu0 0.0
    %374 = vmatprep.subr.mxu0 0.0
    %375 = vmatpush2.xpose.msra.mxu0 0.0
    %376 = vmatprep.subr.mxu0 0.0
    %377 = vmatpush2.xpose.msra.mxu0 0.0
    %378 = vmatprep.subr.mxu0 0.0
    %379 = vmatpush2.xpose.msra.mxu0 0.0
    %380 = vmatprep.subr.mxu0 0.0
    %381 = vmatpush2.xpose.msra.mxu0 0.0
    %382 = vmatprep.subr.mxu0 0.0
    %383 = vmatpush2.xpose.msra.mxu0 0.0
    %384 = vmatprep.subr.mxu0 0.0
    %385 = vmatpush2.xpose.msra.mxu0 0.0
    %386 = vmatprep.subr.mxu0 0.0
    %387 = vmatpush2.xpose.msra.mxu0 0.0
    %388 = vmatprep.subr.mxu0 0.0
    %389 = vmatpush2.xpose.msra.mxu0 0.0
    %390 = vmatprep.subr.mxu0 0.0
    %391 = vmatpush2.xpose.msra.mxu0 0.0
    %392 = vmatprep.subr.mxu0 0.0
    %393 = vmatpush2.xpose.msra.mxu0 0.0
    %394 = vmatprep.subr.mxu0 0.0
    %395 = vmatpush2.xpose.msra.mxu0 0.0
    %396 = vmatprep.mubr.f32.mxu0 %v258
    %397 = vmatmul.mubr.f32.gmra.mxu0 %v257
    %v398 = vpop.f32.mrf.mxu0
    %v399 = vadd.f32 %v329, %v398
    %v400 = vpop.f32.mrf.mxu0
    %401 = vdwg.mxu0
    %v402 = vsel %vm259, 1, 0
    %vm403 = vcmp.eq.s32.totalorder %v402, 1
    %v404 = vsel %vm403, %v399, 0.0
    %v405 = vadd.f32 %v254, %v404
    %v406 = vld [vmem:[#allocation7] sm:$0xff]
    %v407 = vld [vmem:[#allocation7 + $0x8] sm:$0xff]
    %v408 = vld [vmem:[#allocation7 + $0x10] sm:$0xff]
    %v409 = vld [vmem:[#allocation7 + $0x18] sm:$0xff]
    %vm410 = vcmp.eq.s32.totalorder %v97, 2
    %s411 = sld [smem:[#allocation11 + $0x2]]
    %v412 = vstv %s411
    %413 = vmatprep.subr.mxu0 0.0
    %414 = vmatpush1.xpose.msra.mxu0 0.0
    %415 = vmatprep.subr.mxu0 0.0
    %416 = vmatpush1.xpose.msra.mxu0 0.0
    %417 = vmatprep.subr.mxu0 0.0
    %418 = vmatpush1.xpose.msra.mxu0 0.0
    %419 = vmatprep.subr.mxu0 0.0
    %420 = vmatpush1.xpose.msra.mxu0 0.0
    %421 = vmatprep.subr.mxu0 0.0
    %422 = vmatpush1.xpose.msra.mxu0 0.0
    %423 = vmatprep.subr.mxu0 0.0
    %424 = vmatpush1.xpose.msra.mxu0 0.0
    %425 = vmatprep.subr.mxu0 0.0
    %426 = vmatpush1.xpose.msra.mxu0 0.0
    %427 = vmatprep.subr.mxu0 0.0
    %428 = vmatpush1.xpose.msra.mxu0 0.0
    %429 = vmatprep.subr.mxu0 0.0
    %430 = vmatpush1.xpose.msra.mxu0 0.0
    %431 = vmatprep.subr.mxu0 0.0
    %432 = vmatpush1.xpose.msra.mxu0 0.0
    %433 = vmatprep.subr.mxu0 0.0
    %434 = vmatpush1.xpose.msra.mxu0 0.0
    %435 = vmatprep.subr.mxu0 0.0
    %436 = vmatpush1.xpose.msra.mxu0 0.0
    %437 = vmatprep.subr.mxu0 0.0
    %438 = vmatpush1.xpose.msra.mxu0 0.0
    %439 = vmatprep.subr.mxu0 0.0
    %440 = vmatpush1.xpose.msra.mxu0 0.0
    %441 = vmatprep.subr.mxu0 0.0
    %442 = vmatpush1.xpose.msra.mxu0 0.0
    %443 = vmatprep.subr.mxu0 %v107
    %444 = vmatpush1.xpose.msra.mxu0 %v94
    %445 = vmatprep.subr.mxu0 0.0
    %446 = vmatpush2.xpose.msra.mxu0 0.0
    %447 = vmatprep.subr.mxu0 0.0
    %448 = vmatpush2.xpose.msra.mxu0 0.0
    %449 = vmatprep.subr.mxu0 0.0
    %450 = vmatpush2.xpose.msra.mxu0 0.0
    %451 = vmatprep.subr.mxu0 0.0
    %452 = vmatpush2.xpose.msra.mxu0 0.0
    %453 = vmatprep.subr.mxu0 0.0
    %454 = vmatpush2.xpose.msra.mxu0 0.0
    %455 = vmatprep.subr.mxu0 0.0
    %456 = vmatpush2.xpose.msra.mxu0 0.0
    %457 = vmatprep.subr.mxu0 0.0
    %458 = vmatpush2.xpose.msra.mxu0 0.0
    %459 = vmatprep.subr.mxu0 0.0
    %460 = vmatpush2.xpose.msra.mxu0 0.0
    %461 = vmatprep.subr.mxu0 0.0
    %462 = vmatpush2.xpose.msra.mxu0 0.0
    %463 = vmatprep.subr.mxu0 0.0
    %464 = vmatpush2.xpose.msra.mxu0 0.0
    %465 = vmatprep.subr.mxu0 0.0
    %466 = vmatpush2.xpose.msra.mxu0 0.0
    %467 = vmatprep.subr.mxu0 0.0
    %468 = vmatpush2.xpose.msra.mxu0 0.0
    %469 = vmatprep.subr.mxu0 0.0
    %470 = vmatpush2.xpose.msra.mxu0 0.0
    %471 = vmatprep.subr.mxu0 0.0
    %472 = vmatpush2.xpose.msra.mxu0 0.0
    %473 = vmatprep.subr.mxu0 0.0
    %474 = vmatpush2.xpose.msra.mxu0 0.0
    %475 = vmatprep.subr.mxu0 0.0
    %476 = vmatpush2.xpose.msra.mxu0 0.0
    %477 = vmatprep.mubr.f32.mxu0 %v407
    %478 = vmatmul.mubr.f32.gmra.mxu0 %v406
    %v479 = vpop.f32.mrf.mxu0
    %v480 = vadd.f32 %v412, %v479
    %v481 = vpop.f32.mrf.mxu0
    %482 = vdwg.mxu0
    %483 = vmatprep.subr.mxu0 0.0
    %484 = vmatpush1.xpose.msra.mxu0 0.0
    %485 = vmatprep.subr.mxu0 0.0
    %486 = vmatpush1.xpose.msra.mxu0 0.0
    %487 = vmatprep.subr.mxu0 0.0
    %488 = vmatpush1.xpose.msra.mxu0 0.0
    %489 = vmatprep.subr.mxu0 0.0
    %490 = vmatpush1.xpose.msra.mxu0 0.0
    %491 = vmatprep.subr.mxu0 0.0
    %492 = vmatpush1.xpose.msra.mxu0 0.0
    %493 = vmatprep.subr.mxu0 0.0
    %494 = vmatpush1.xpose.msra.mxu0 0.0
    %495 = vmatprep.subr.mxu0 0.0
    %496 = vmatpush1.xpose.msra.mxu0 0.0
    %497 = vmatprep.subr.mxu0 0.0
    %498 = vmatpush1.xpose.msra.mxu0 0.0
    %499 = vmatprep.subr.mxu0 0.0
    %500 = vmatpush1.xpose.msra.mxu0 0.0
    %501 = vmatprep.subr.mxu0 0.0
    %502 = vmatpush1.xpose.msra.mxu0 0.0
    %503 = vmatprep.subr.mxu0 0.0
    %504 = vmatpush1.xpose.msra.mxu0 0.0
    %505 = vmatprep.subr.mxu0 0.0
    %506 = vmatpush1.xpose.msra.mxu0 0.0
    %507 = vmatprep.subr.mxu0 0.0
    %508 = vmatpush1.xpose.msra.mxu0 0.0
    %509 = vmatprep.subr.mxu0 0.0
    %510 = vmatpush1.xpose.msra.mxu0 0.0
    %511 = vmatprep.subr.mxu0 0.0
    %512 = vmatpush1.xpose.msra.mxu0 0.0
    %513 = vmatprep.subr.mxu0 %v108
    %514 = vmatpush1.xpose.msra.mxu0 %v95
    %515 = vmatprep.subr.mxu0 0.0
    %516 = vmatpush2.xpose.msra.mxu0 0.0
    %517 = vmatprep.subr.mxu0 0.0
    %518 = vmatpush2.xpose.msra.mxu0 0.0
    %519 = vmatprep.subr.mxu0 0.0
    %520 = vmatpush2.xpose.msra.mxu0 0.0
    %521 = vmatprep.subr.mxu0 0.0
    %522 = vmatpush2.xpose.msra.mxu0 0.0
    %523 = vmatprep.subr.mxu0 0.0
    %524 = vmatpush2.xpose.msra.mxu0 0.0
    %525 = vmatprep.subr.mxu0 0.0
    %526 = vmatpush2.xpose.msra.mxu0 0.0
    %527 = vmatprep.subr.mxu0 0.0
    %528 = vmatpush2.xpose.msra.mxu0 0.0
    %529 = vmatprep.subr.mxu0 0.0
    %530 = vmatpush2.xpose.msra.mxu0 0.0
    %531 = vmatprep.subr.mxu0 0.0
    %532 = vmatpush2.xpose.msra.mxu0 0.0
    %533 = vmatprep.subr.mxu0 0.0
    %534 = vmatpush2.xpose.msra.mxu0 0.0
    %535 = vmatprep.subr.mxu0 0.0
    %536 = vmatpush2.xpose.msra.mxu0 0.0
    %537 = vmatprep.subr.mxu0 0.0
    %538 = vmatpush2.xpose.msra.mxu0 0.0
    %539 = vmatprep.subr.mxu0 0.0
    %540 = vmatpush2.xpose.msra.mxu0 0.0
    %541 = vmatprep.subr.mxu0 0.0
    %542 = vmatpush2.xpose.msra.mxu0 0.0
    %543 = vmatprep.subr.mxu0 0.0
    %544 = vmatpush2.xpose.msra.mxu0 0.0
    %545 = vmatprep.subr.mxu0 0.0
    %546 = vmatpush2.xpose.msra.mxu0 0.0
    %547 = vmatprep.mubr.f32.mxu0 %v409
    %548 = vmatmul.mubr.f32.gmra.mxu0 %v408
    %v549 = vpop.f32.mrf.mxu0
    %v550 = vadd.f32 %v480, %v549
    %v551 = vpop.f32.mrf.mxu0
    %552 = vdwg.mxu0
    %v553 = vsel %vm410, 1, 0
    %vm554 = vcmp.eq.s32.totalorder %v553, 1
    %v555 = vsel %vm554, %v550, 0.0
    %v556 = vadd.f32 %v405, %v555
    %v557 = vld [vmem:[#allocation8] sm:$0xff]
    %v558 = vld [vmem:[#allocation8 + $0x8] sm:$0xff]
    %v559 = vld [vmem:[#allocation8 + $0x10] sm:$0xff]
    %v560 = vld [vmem:[#allocation8 + $0x18] sm:$0xff]
    %vm561 = vcmp.eq.s32.totalorder %v97, 3
    %s562 = sld [smem:[#allocation11 + $0x3]]
    %v563 = vstv %s562
    %564 = vmatprep.subr.mxu0 0.0
    %565 = vmatpush1.xpose.msra.mxu0 0.0
    %566 = vmatprep.subr.mxu0 0.0
    %567 = vmatpush1.xpose.msra.mxu0 0.0
    %568 = vmatprep.subr.mxu0 0.0
    %569 = vmatpush1.xpose.msra.mxu0 0.0
    %570 = vmatprep.subr.mxu0 0.0
    %571 = vmatpush1.xpose.msra.mxu0 0.0
    %572 = vmatprep.subr.mxu0 0.0
    %573 = vmatpush1.xpose.msra.mxu0 0.0
    %574 = vmatprep.subr.mxu0 0.0
    %575 = vmatpush1.xpose.msra.mxu0 0.0
    %576 = vmatprep.subr.mxu0 0.0
    %577 = vmatpush1.xpose.msra.mxu0 0.0
    %578 = vmatprep.subr.mxu0 0.0
    %579 = vmatpush1.xpose.msra.mxu0 0.0
    %580 = vmatprep.subr.mxu0 0.0
    %581 = vmatpush1.xpose.msra.mxu0 0.0
    %582 = vmatprep.subr.mxu0 0.0
    %583 = vmatpush1.xpose.msra.mxu0 0.0
    %584 = vmatprep.subr.mxu0 0.0
    %585 = vmatpush1.xpose.msra.mxu0 0.0
    %586 = vmatprep.subr.mxu0 0.0
    %587 = vmatpush1.xpose.msra.mxu0 0.0
    %588 = vmatprep.subr.mxu0 0.0
    %589 = vmatpush1.xpose.msra.mxu0 0.0
    %590 = vmatprep.subr.mxu0 0.0
    %591 = vmatpush1.xpose.msra.mxu0 0.0
    %592 = vmatprep.subr.mxu0 0.0
    %593 = vmatpush1.xpose.msra.mxu0 0.0
    %594 = vmatprep.subr.mxu0 %v107
    %595 = vmatpush1.xpose.msra.mxu0 %v94
    %596 = vmatprep.subr.mxu0 0.0
    %597 = vmatpush2.xpose.msra.mxu0 0.0
    %598 = vmatprep.subr.mxu0 0.0
    %599 = vmatpush2.xpose.msra.mxu0 0.0
    %600 = vmatprep.subr.mxu0 0.0
    %601 = vmatpush2.xpose.msra.mxu0 0.0
    %602 = vmatprep.subr.mxu0 0.0
    %603 = vmatpush2.xpose.msra.mxu0 0.0
    %604 = vmatprep.subr.mxu0 0.0
    %605 = vmatpush2.xpose.msra.mxu0 0.0
    %606 = vmatprep.subr.mxu0 0.0
    %607 = vmatpush2.xpose.msra.mxu0 0.0
    %608 = vmatprep.subr.mxu0 0.0
    %609 = vmatpush2.xpose.msra.mxu0 0.0
    %610 = vmatprep.subr.mxu0 0.0
    %611 = vmatpush2.xpose.msra.mxu0 0.0
    %612 = vmatprep.subr.mxu0 0.0
    %613 = vmatpush2.xpose.msra.mxu0 0.0
    %614 = vmatprep.subr.mxu0 0.0
    %615 = vmatpush2.xpose.msra.mxu0 0.0
    %616 = vmatprep.subr.mxu0 0.0
    %617 = vmatpush2.xpose.msra.mxu0 0.0
    %618 = vmatprep.subr.mxu0 0.0
    %619 = vmatpush2.xpose.msra.mxu0 0.0
    %620 = vmatprep.subr.mxu0 0.0
    %621 = vmatpush2.xpose.msra.mxu0 0.0
    %622 = vmatprep.subr.mxu0 0.0
    %623 = vmatpush2.xpose.msra.mxu0 0.0
    %624 = vmatprep.subr.mxu0 0.0
    %625 = vmatpush2.xpose.msra.mxu0 0.0
    %626 = vmatprep.subr.mxu0 0.0
    %627 = vmatpush2.xpose.msra.mxu0 0.0
    %628 = vmatprep.mubr.f32.mxu0 %v558
    %629 = vmatmul.mubr.f32.gmra.mxu0 %v557
    %v630 = vpop.f32.mrf.mxu0
    %v631 = vadd.f32 %v563, %v630
    %v632 = vpop.f32.mrf.mxu0
    %633 = vdwg.mxu0
    %634 = vmatprep.subr.mxu0 0.0
    %635 = vmatpush1.xpose.msra.mxu0 0.0
    %636 = vmatprep.subr.mxu0 0.0
    %637 = vmatpush1.xpose.msra.mxu0 0.0
    %638 = vmatprep.subr.mxu0 0.0
    %639 = vmatpush1.xpose.msra.mxu0 0.0
    %640 = vmatprep.subr.mxu0 0.0
    %641 = vmatpush1.xpose.msra.mxu0 0.0
    %642 = vmatprep.subr.mxu0 0.0
    %643 = vmatpush1.xpose.msra.mxu0 0.0
    %644 = vmatprep.subr.mxu0 0.0
    %645 = vmatpush1.xpose.msra.mxu0 0.0
    %646 = vmatprep.subr.mxu0 0.0
    %647 = vmatpush1.xpose.msra.mxu0 0.0
    %648 = vmatprep.subr.mxu0 0.0
    %649 = vmatpush1.xpose.msra.mxu0 0.0
    %650 = vmatprep.subr.mxu0 0.0
    %651 = vmatpush1.xpose.msra.mxu0 0.0
    %652 = vmatprep.subr.mxu0 0.0
    %653 = vmatpush1.xpose.msra.mxu0 0.0
    %654 = vmatprep.subr.mxu0 0.0
    %655 = vmatpush1.xpose.msra.mxu0 0.0
    %656 = vmatprep.subr.mxu0 0.0
    %657 = vmatpush1.xpose.msra.mxu0 0.0
    %658 = vmatprep.subr.mxu0 0.0
    %659 = vmatpush1.xpose.msra.mxu0 0.0
    %660 = vmatprep.subr.mxu0 0.0
    %661 = vmatpush1.xpose.msra.mxu0 0.0
    %662 = vmatprep.subr.mxu0 0.0
    %663 = vmatpush1.xpose.msra.mxu0 0.0
    %664 = vmatprep.subr.mxu0 %v108
    %665 = vmatpush1.xpose.msra.mxu0 %v95
    %666 = vmatprep.subr.mxu0 0.0
    %667 = vmatpush2.xpose.msra.mxu0 0.0
    %668 = vmatprep.subr.mxu0 0.0
    %669 = vmatpush2.xpose.msra.mxu0 0.0
    %670 = vmatprep.subr.mxu0 0.0
    %671 = vmatpush2.xpose.msra.mxu0 0.0
    %672 = vmatprep.subr.mxu0 0.0
    %673 = vmatpush2.xpose.msra.mxu0 0.0
    %674 = vmatprep.subr.mxu0 0.0
    %675 = vmatpush2.xpose.msra.mxu0 0.0
    %676 = vmatprep.subr.mxu0 0.0
    %677 = vmatpush2.xpose.msra.mxu0 0.0
    %678 = vmatprep.subr.mxu0 0.0
    %679 = vmatpush2.xpose.msra.mxu0 0.0
    %680 = vmatprep.subr.mxu0 0.0
    %681 = vmatpush2.xpose.msra.mxu0 0.0
    %682 = vmatprep.subr.mxu0 0.0
    %683 = vmatpush2.xpose.msra.mxu0 0.0
    %684 = vmatprep.subr.mxu0 0.0
    %685 = vmatpush2.xpose.msra.mxu0 0.0
    %686 = vmatprep.subr.mxu0 0.0
    %687 = vmatpush2.xpose.msra.mxu0 0.0
    %688 = vmatprep.subr.mxu0 0.0
    %689 = vmatpush2.xpose.msra.mxu0 0.0
    %690 = vmatprep.subr.mxu0 0.0
    %691 = vmatpush2.xpose.msra.mxu0 0.0
    %692 = vmatprep.subr.mxu0 0.0
    %693 = vmatpush2.xpose.msra.mxu0 0.0
    %694 = vmatprep.subr.mxu0 0.0
    %695 = vmatpush2.xpose.msra.mxu0 0.0
    %696 = vmatprep.subr.mxu0 0.0
    %697 = vmatpush2.xpose.msra.mxu0 0.0
    %698 = vmatprep.mubr.f32.mxu0 %v560
    %699 = vmatmul.mubr.f32.gmra.mxu0 %v559
    %v700 = vpop.f32.mrf.mxu0
    %v701 = vadd.f32 %v631, %v700
    %v702 = vpop.f32.mrf.mxu0
    %703 = vdwg.mxu0
    %v704 = vsel %vm561, 1, 0
    %vm705 = vcmp.eq.s32.totalorder %v704, 1
    %v706 = vsel %vm705, %v701, 0.0
    %v707 = vadd.f32 %v556, %v706
    %v708 = vxor.u32 %v707, 2147483648
    %v709 = vmul.f32 %v708, 1.442695
    %v710 = vpow.pop %v709
    %v711 = vadd.f32 %v710, 1.0
    %v712 = vrcp.pop %v711
    %v713 = vmul.f32 1.0, %v712
    %vm714 = vcmask 31744
    %715 = vst.msk [vmem:[%s6] sm:$0xff] %vm714, %v713
    // Predicated region
    $region50: #{fc_sigmoid_heads.1} parent=1 // pred_check
      _
    $region51: #{fc_sigmoid_heads.1} parent=1 // pred_check_branch
      %717 = sbr.rel (0) target = $region53
    $region52: #{fc_sigmoid_heads.1} parent=1 // pred_region
      _
    $region53: #{fc_sigmoid_heads.1} parent=1 // pred_fallthru
      _
    // Predicated region
    $region54: #{fc_sigmoid_heads.1} parent=1 // pred_check
      _
    $region55: #{fc_sigmoid_heads.1} parent=1 // pred_check_branch
      %719 = sbr.rel (0) target = $region57
    $region56: #{fc_sigmoid_heads.1} parent=1 // pred_region
      _
    $region57: #{fc_sigmoid_heads.1} parent=1 // pred_fallthru
      _
    %720 = vsyncpa [#allocation3], 1
    %721 = vsyncpa [#allocation6], 1
    %722 = vsyncpa [#allocation9], 1
    %723 = vsyncpa [#allocation4], 1

</llo_original>
